<compile_context>
chip_gen: v5e
topology: v5e:2x2
jax: 0.10.0
libtpu: 0.0.40
codegen_flags: <defaults>
</compile_context>

<pallas_src>
import math

import jax
import jax.numpy as jnp
from jax.experimental import pallas as pl
from jax.experimental.pallas import tpu as pltpu

_MIB = 1024 * 1024


def _layer_scale_kernel(x_ref, gamma_ref, o_ref):
    # x_ref: (tm, tn) tile; gamma_ref: (1, tn) resident row. VPU broadcast
    # multiply in the promoted dtype, cast back to the activation dtype.
    o_ref[...] = (x_ref[...] * gamma_ref[...]).astype(o_ref.dtype)


def _sublane_packing(dtype) -> int:
    itemsize = jnp.dtype(dtype).itemsize
    return 8 * max(1, 4 // itemsize)  # 8 f32, 16 bf16, 32 int8/fp8


def _chip_params() -> tuple[int, int, int]:
    """(target_tile_bytes, scoped_vmem_limit, hard_vmem_cap) per TPU generation."""
    try:
        kind = jax.devices()[0].device_kind.lower()
    except Exception:
        kind = ""
    if "v7" in kind or "7x" in kind:
        # 64 MiB physical VMEM; ~4 MiB tiles -> ~16 MiB double-buffered footprint.
        return 4 * _MIB, 32 * _MIB, 56 * _MIB
    if "v6" in kind:
        # 128 MiB physical VMEM, ~1.4 TB/s HBM: bigger tiles are essentially free.
        return 6 * _MIB, 64 * _MIB, 100 * _MIB
    if "v5" in kind:
        # 128 MiB physical VMEM, ~0.82 TB/s HBM: per-step overhead already small.
        return 6 * _MIB, 64 * _MIB, 100 * _MIB
    # Unknown chip: conservative settings that are safe on 64 MiB-VMEM parts.
    return 4 * _MIB, 32 * _MIB, 56 * _MIB


def layer_scale(x: jax.Array, gamma: jax.Array) -> jax.Array:
    """Apply LayerScale: out = x * gamma, gamma broadcast along the last dim.

    x: (..., D)   gamma: (D,)
    """
    orig_shape = x.shape
    D = orig_shape[-1]
    assert gamma.shape == (D,)
    total = x.size
    if total == 0:
        return x

    target_tile_bytes, vmem_limit, vmem_cap = _chip_params()

    # ---- layout: make the last (lane) dim a dense multiple of 128 when possible.
    if D % 128 == 0:
        W = D
        x2 = x.reshape(-1, W)
        gamma_row = gamma.reshape(1, W)
    else:
        W = (D * 128) // math.gcd(D, 128)  # lcm(D, 128)
        if total % W == 0 and W <= 32768:
            # fold rows into the lane axis; tile gamma to the folded width
            x2 = x.reshape(-1, W)
            gamma_row = jnp.tile(gamma, W // D).reshape(1, W)
        else:
            # fallback: full-D blocks (still correct; lane stores may be masked)
            W = D
            x2 = x.reshape(-1, W)
            gamma_row = gamma.reshape(1, W)
    M = x2.shape[0]

    itemsize = jnp.dtype(x.dtype).itemsize
    packing = _sublane_packing(x.dtype)

    # Per-tile byte budget with headroom for the double-buffered in+out footprint
    # (~4x tile) plus the resident gamma row, kept under the scoped VMEM limit.
    budget = min(target_tile_bytes, (vmem_limit // 4) - 256 * 1024)
    budget = max(budget, packing * 128 * itemsize)

    # ---- column tile: full-width slabs unless one packed row group blows the budget.
    row_group_bytes = packing * W * itemsize
    if row_group_bytes <= budget or W % 128 != 0:
        tn = W  # contiguous (tm, W) slab -> maximal linear DMA, gamma loaded once
    else:
        tn = 128
        for cand in (8192, 4096, 2048, 1024, 512, 256, 128):
            if W % cand == 0 and packing * cand * itemsize <= budget:
                tn = cand
                break
    num_col_blocks = W // tn

    # ---- row tile from the byte budget, aligned to sublane packing.
    tm = max(packing, (budget // (tn * itemsize)) // packing * packing)
    tm = min(tm, 8192)
    if tm >= M:
        if M > packing:
            # Keep >= 2 row blocks: shards work across both v7x TensorCores and
            # gives the software pipeline something to overlap on single-TC chips.
            half = -(-M // 2)
            tm = ((half + packing - 1) // packing) * packing
            if tm >= M:
                tm = packing
        else:
            tm = M  # single full-extent block (always a legal block shape)
    num_row_blocks = pl.cdiv(M, tm)

    # Make sure the actual footprint fits the scoped limit (covers the wide,
    # non-128-divisible fallback), capped below physical VMEM.
    tile_bytes = tm * tn * itemsize
    gamma_bytes = 2 * tn * jnp.dtype(gamma_row.dtype).itemsize
    needed = 4 * tile_bytes + gamma_bytes + _MIB
    vmem_limit_bytes = int(min(max(vmem_limit, needed), vmem_cap))

    # Column axis is the OUTER grid dim so gamma's block index is constant across
    # the inner row sweep (no per-step re-fetch when column tiling is active).
    out = pl.pallas_call(
        _layer_scale_kernel,
        out_shape=jax.ShapeDtypeStruct((M, W), x.dtype),
        grid_spec=pltpu.PrefetchScalarGridSpec(
            num_scalar_prefetch=0,
            grid=(num_col_blocks, num_row_blocks),
            in_specs=[
                pl.BlockSpec((tm, tn), lambda j, i: (i, j)),
                pl.BlockSpec((1, tn), lambda j, i: (0, j)),
            ],
            out_specs=pl.BlockSpec((tm, tn), lambda j, i: (i, j)),
        ),
        compiler_params=pltpu.CompilerParams(
            dimension_semantics=("parallel", "parallel"),
            vmem_limit_bytes=vmem_limit_bytes,
        ),
    )(x2, gamma_row)

    return out.reshape(orig_shape)


if __name__ == "__main__":
    # Module params: dim, init_values -> gamma = init_values * ones(dim)
    B, N, D = 2, 8, 32
    init_values = 1e-5

    key = jax.random.PRNGKey(0)
    x = jax.random.normal(key, (B, N, D), dtype=jnp.float32)
    gamma = jnp.full((D,), init_values, dtype=jnp.float32)

    out = jax.block_until_ready(layer_scale(x, gamma))
    ref = x * gamma
    assert out.shape == x.shape
    assert jnp.allclose(out, ref, atol=1e-6), "mismatch vs reference (folded path)"

    # Secondary check: 128-aligned hidden dim exercises the multi-row-block path.
    D2 = 128
    x2 = jax.random.normal(jax.random.PRNGKey(0), (B, N, D2), dtype=jnp.float32)
    gamma2 = jnp.full((D2,), init_values, dtype=jnp.float32)
    out2 = jax.block_until_ready(layer_scale(x2, gamma2))
    assert jnp.allclose(out2, x2 * gamma2, atol=1e-6), "mismatch vs reference (aligned path)"

    print("KERNEL_OK")
</pallas_src>

<mosaic_0001>
module attributes {stable_mosaic.version = 11 : i64} {
  func.func @_layer_scale_kernel(%arg0: i32, %arg1: i32, %arg2: memref<4x128xf32, #tpu.memory_space<vmem>>, %arg3: memref<1x128xf32, #tpu.memory_space<vmem>>, %arg4: memref<4x128xf32, #tpu.memory_space<vmem>>) attributes {dimension_semantics = [#tpu.dimension_semantics<parallel>, #tpu.dimension_semantics<parallel>], iteration_bounds = array<i64: 1, 1>, scalar_prefetch = 0 : i64, scratch_operands = 0 : i64, tpu.core_type = #tpu.core_type<tc>, window_params = [{transform_indices = @transform_0, window_bounds = array<i64: 4, 128>}, {transform_indices = @transform_1, window_bounds = array<i64: 1, 128>}, {transform_indices = @transform_2, window_bounds = array<i64: 4, 128>}]} {
    %c0 = arith.constant 0 : index
    %c0_0 = arith.constant 0 : index
    %0 = vector.load %arg2[%c0, %c0_0] : memref<4x128xf32, #tpu.memory_space<vmem>>, vector<4x128xf32>
    %c0_1 = arith.constant 0 : index
    %c0_2 = arith.constant 0 : index
    %1 = vector.load %arg3[%c0_1, %c0_2] : memref<1x128xf32, #tpu.memory_space<vmem>>, vector<1x128xf32>
    %2 = vector.broadcast %1 : vector<1x128xf32> to vector<4x128xf32>
    %3 = arith.mulf %0, %2 : vector<4x128xf32>
    %c0_3 = arith.constant 0 : index
    %c0_4 = arith.constant 0 : index
    %4 = vector.load %arg4[%c0_3, %c0_4] : memref<4x128xf32, #tpu.memory_space<vmem>>, vector<4x128xf32>
    tpu.vector_store %arg4[%c0_3, %c0_4], %3 {strides = array<i32>} : memref<4x128xf32, #tpu.memory_space<vmem>>, vector<4x128xf32>,
    return
  }
  func.func @transform_0(%arg0: i32, %arg1: i32) -> (i32, i32) {
    %c0_i32 = arith.constant 0 : i32
    return %arg1, %arg0 : i32, i32
  }
  func.func @transform_1(%arg0: i32, %arg1: i32) -> (i32, i32) {
    %c0_i32 = arith.constant 0 : i32
    %c0_i32_0 = arith.constant 0 : i32
    return %c0_i32, %arg0 : i32, i32
  }
  func.func @transform_2(%arg0: i32, %arg1: i32) -> (i32, i32) {
    %c0_i32 = arith.constant 0 : i32
    return %arg1, %arg0 : i32, i32
  }
}

</mosaic_0001>

<llo_original>
// kernel: tpu_custom_call.1
$region0: #{tpu_custom_call.1}
  #allocation0 [shape = 'u32[]', space=smem, size = 0x4, offset = 0x4, fixed_abs, tag = 'smem constant byte address 0x4 - core index']
  #allocation1 [shape = 'u32[72,128]{1,0:T(1,128)}', space=vmem, size = 0x9000, scoped, tag = 'internal scratch']
  %s0 = inlined_call_operand.hbm [shape: f32[4,128], index: 0, kind: input, shape index: {}]
  %s1 = inlined_call_operand.hbm [shape: f32[1,128], index: 1, kind: input, shape index: {}]
  %s2 = inlined_call_operand.hbm [shape: f32[4,128], index: 2, kind: output, shape index: {}]
  %s3 = sld [smem:[#allocation0]]
  $region26: #{tpu_custom_call.1} parent=0
    _
  %s5 = ssub.s32 1, %s3
  %s6 = scalar_select 0, %s5, %s3
  $region1: #{tpu_custom_call.1} parent=0
    #allocation2 [shape = 'u8[2048]{0}', space=vmem, size = 0x800, scoped, tag = 'input window, operand 0, single buffered']
    #allocation3 [shape = 's32[1]{0}', space=sflag, size = 0x4, scoped, tag = 'scoped memory for tpu_custom_call.1']
    #allocation4 [shape = 's32[1]{0}', space=sflag, size = 0x4, scoped, tag = 'scoped memory for tpu_custom_call.1']
    #allocation5 [shape = 'u8[512]{0}', space=vmem, size = 0x400, scoped, tag = 'input window, operand 1, single buffered']
    #allocation6 [shape = 's32[1]{0}', space=sflag, size = 0x4, scoped, tag = 'scoped memory for tpu_custom_call.1']
    #allocation7 [shape = 'u8[2048]{0}', space=vmem, size = 0x800, scoped, tag = 'output window, operand 0, single buffered']
    %7 = vsyncpa [#allocation3], 0
    %8 = vsyncpa [#allocation6], 0
    %9 = vsyncpa [#allocation4], 0
    // Predicated region
    $region2: #{tpu_custom_call.1} parent=1 // pred_check
      _
    $region3: #{tpu_custom_call.1} parent=1 // pred_check_branch
      %11 = sbr.rel (0) target = $region5
    $region4: #{tpu_custom_call.1} parent=1 // pred_region
      %13 = vsyncadd [#allocation3], 0
      %s15 = sshll.u32 %s0, 4
      %s16 = int_to_ptr.hbm [resolvable:$true] %s15
      %s17 = sshll.u32 [#allocation2], 4
      %s18 = int_to_ptr.vmem [resolvable:$true] %s17
      %20 = dma.hbm_to_vmem [thread:$0]  %s16, 64, %s18, [#allocation3]
    $region5: #{tpu_custom_call.1} parent=1 // pred_fallthru
      _
    // Predicated region
    $region6: #{tpu_custom_call.1} parent=1 // pred_check
      _
    $region7: #{tpu_custom_call.1} parent=1 // pred_check_branch
      %22 = sbr.rel (0) target = $region9
    $region8: #{tpu_custom_call.1} parent=1 // pred_region
      %24 = vsyncadd [#allocation6], 0
      %s26 = sshll.u32 %s1, 4
      %s27 = int_to_ptr.hbm [resolvable:$true] %s26
      %s28 = sshll.u32 [#allocation5], 4
      %s29 = int_to_ptr.vmem [resolvable:$true] %s28
      %31 = dma.hbm_to_vmem [thread:$0]  %s27, 16, %s29, [#allocation6]
    $region9: #{tpu_custom_call.1} parent=1 // pred_fallthru
      _
    // Predicated region
    $region10: #{tpu_custom_call.1} parent=1 // pred_check
      _
    $region11: #{tpu_custom_call.1} parent=1 // pred_check_branch
      %33 = sbr.rel (0) target = $region13
    $region12: #{tpu_custom_call.1} parent=1 // pred_region
      %35 = dma.done [#allocation3], 64
    $region13: #{tpu_custom_call.1} parent=1 // pred_fallthru
      _
    // Predicated region
    $region14: #{tpu_custom_call.1} parent=1 // pred_check
      _
    $region15: #{tpu_custom_call.1} parent=1 // pred_check_branch
      %37 = sbr.rel (0) target = $region17
    $region16: #{tpu_custom_call.1} parent=1 // pred_region
      %39 = dma.done [#allocation6], 16
    $region17: #{tpu_custom_call.1} parent=1 // pred_fallthru
      _
    %v40 = vld [vmem:[#allocation2] sm:$0xf]
    %v41 = vld [vmem:[#allocation5] sm:$0x1]
    %v43 = vperm.slane %v41, 0
    %v45 = vmul.f32 %v40, %v43
    %46 = vst [vmem:[#allocation7] sm:$0xf] %v45
    // Predicated region
    $region18: #{tpu_custom_call.1} parent=1 // pred_check
      _
    $region19: #{tpu_custom_call.1} parent=1 // pred_check_branch
      %48 = sbr.rel (0) target = $region21
    $region20: #{tpu_custom_call.1} parent=1 // pred_region
      %50 = vsyncadd [#allocation4], 0
      %s52 = sshll.u32 [#allocation7], 4
      %s53 = int_to_ptr.vmem [resolvable:$true] %s52
      %s54 = sshll.u32 %s2, 4
      %s55 = int_to_ptr.hbm [resolvable:$true] %s54
      %57 = dma.vmem_to_hbm [thread:$0]  %s53, 64, %s55, [#allocation4]
    $region21: #{tpu_custom_call.1} parent=1 // pred_fallthru
      _
    // Predicated region
    $region22: #{tpu_custom_call.1} parent=1 // pred_check
      _
    $region23: #{tpu_custom_call.1} parent=1 // pred_check_branch
      %59 = sbr.rel (0) target = $region25
    $region24: #{tpu_custom_call.1} parent=1 // pred_region
      %61 = dma.done [#allocation4], 64
    $region25: #{tpu_custom_call.1} parent=1 // pred_fallthru
      _
    %62 = vsyncpa [#allocation3], 1
    %63 = vsyncpa [#allocation6], 1
    %64 = vsyncpa [#allocation4], 1

</llo_original>
